<compile_context>
chip_gen: v7x
topology: tpu7x:2x2x1
jax: 0.10.0
libtpu: 0.0.40
codegen_flags: <defaults>
</compile_context>

<pallas_src>
import jax
import jax.numpy as jnp
from jax.experimental import pallas as pl
from jax.experimental.pallas import tpu as pltpu


IN_FEATURES = 12
HIDDEN = 256
LANE_TILE = 128   # batch tile (on lanes) for the gridded large-batch path


def qnet_kernel(xT_ref, w1T_ref, b1_ref, w2_ref, b2_ref, o_ref):
    """One batch tile of the Qnet MLP, batch on the 128-lane axis.

    xT_ref  : [12, TB]   inputs, transposed (batch -> lanes)
    w1T_ref : [256, 12]  fc1 weight (PyTorch [out, in] layout)
    b1_ref  : [256, 1]   fc1 bias as a column
    w2_ref  : [256, 1]   fc2 weight as a column
    b2_ref  : [1, 1]     fc2 bias (SMEM scalar)
    o_ref   : [1, TB]    output row (lane-dense)
    """
    # fc1 on the MXU: [256,12] @ [12,TB] -> [256,TB], f32 accumulate.
    h = jnp.dot(w1T_ref[...], xT_ref[...], preferred_element_type=jnp.float32)
    h = jnp.maximum(h + b1_ref[...], 0.0)          # bias bcast over lanes + ReLU

    # fc2 (out_features=1) off the MXU: VPU multiply + cross-sublane reduce.
    y = jnp.sum(h * w2_ref[...], axis=0, keepdims=True)         # [1, TB]

    # Folded epilogue: (tanh(y + b2) + 1) / 2 * 255 == tanh(.) * 127.5 + 127.5
    o_ref[...] = jnp.tanh(y + b2_ref[0, 0]) * 127.5 + 127.5


def qnet_forward(x, w1T, b1_col, w2_col, b2):
    """Qnet forward.  x: [B, 12] f32  ->  [B, 1] f32."""
    B = x.shape[0]
    xT = x.T                      # [12, B]: batch on lanes (tiny XLA transpose)
    b2 = b2.reshape(1, 1)

    if B > LANE_TILE and B % LANE_TILE == 0:
        # Large batch: tile the batch (lane) axis, keep weights resident
        # (index_map -> (0,0)), shard the batch axis across TensorCores.
        out = pl.pallas_call(
            qnet_kernel,
            out_shape=jax.ShapeDtypeStruct((1, B), jnp.float32),
            grid=(B // LANE_TILE,),
            in_specs=[
                pl.BlockSpec((IN_FEATURES, LANE_TILE), lambda i: (0, i)),
                pl.BlockSpec((HIDDEN, IN_FEATURES), lambda i: (0, 0)),
                pl.BlockSpec((HIDDEN, 1), lambda i: (0, 0)),
                pl.BlockSpec((HIDDEN, 1), lambda i: (0, 0)),
                pl.BlockSpec((1, 1), lambda i: (0, 0), memory_space=pltpu.SMEM),
            ],
            out_specs=pl.BlockSpec((1, LANE_TILE), lambda i: (0, i)),
            compiler_params=pltpu.CompilerParams(
                dimension_semantics=("parallel",)),
        )(xT, w1T, b1_col, w2_col, b2)
    else:
        # Small batch: everything fits comfortably in VMEM, single invocation.
        out = pl.pallas_call(
            qnet_kernel,
            out_shape=jax.ShapeDtypeStruct((1, B), jnp.float32),
            in_specs=[
                pl.BlockSpec(memory_space=pltpu.VMEM),   # xT   [12, B]
                pl.BlockSpec(memory_space=pltpu.VMEM),   # W1T  [256, 12]
                pl.BlockSpec(memory_space=pltpu.VMEM),   # b1   [256, 1]
                pl.BlockSpec(memory_space=pltpu.VMEM),   # w2   [256, 1]
                pl.BlockSpec(memory_space=pltpu.SMEM),   # b2   [1, 1] scalar
            ],
            out_specs=pl.BlockSpec(memory_space=pltpu.VMEM),
        )(xT, w1T, b1_col, w2_col, b2)

    return out.reshape(B, 1)


def init_params(key):
    """nn.Linear default init U(-1/sqrt(fan_in), +1/sqrt(fan_in)), stored
    directly in the kernel's (transposed / column) layout."""
    k1, k2, k3, k4 = jax.random.split(key, 4)
    lim1 = 1.0 / jnp.sqrt(jnp.float32(IN_FEATURES))
    lim2 = 1.0 / jnp.sqrt(jnp.float32(HIDDEN))
    w1T = jax.random.uniform(k1, (HIDDEN, IN_FEATURES), jnp.float32, -lim1, lim1)
    b1_col = jax.random.uniform(k2, (HIDDEN, 1), jnp.float32, -lim1, lim1)
    w2_col = jax.random.uniform(k3, (HIDDEN, 1), jnp.float32, -lim2, lim2)
    b2 = jax.random.uniform(k4, (1, 1), jnp.float32, -lim2, lim2)
    return w1T, b1_col, w2_col, b2


if __name__ == "__main__":
    key = jax.random.PRNGKey(0)
    kx, kp = jax.random.split(key)
    w1T, b1_col, w2_col, b2 = init_params(kp)

    def reference(xb):
        h = jnp.maximum(xb @ w1T.T + b1_col.reshape(1, HIDDEN), 0.0)
        y = h @ w2_col + b2.reshape(1, 1)
        return (jnp.tanh(y) + 1.0) / 2.0 * 255.0

    # B=8 exercises the single-shot small-batch path; B=256 the tiled
    # (grid over batch lanes, resident weights, "parallel") path.
    for B in (8, 256):
        xb = jax.random.normal(jax.random.fold_in(kx, B), (B, IN_FEATURES),
                               jnp.float32)
        out = jax.block_until_ready(qnet_forward(xb, w1T, b1_col, w2_col, b2))
        ref = reference(xb)
        assert out.shape == (B, 1)
        assert jnp.allclose(out, ref, atol=1e-3, rtol=1e-3)

    print("KERNEL_OK")
</pallas_src>

<mosaic_0001>
module attributes {stable_mosaic.version = 11 : i64} {
  func.func @qnet_kernel(%arg0: memref<12x8xf32, #tpu.memory_space<vmem>>, %arg1: memref<256x12xf32, #tpu.memory_space<vmem>>, %arg2: memref<256x1xf32, #tpu.memory_space<vmem>>, %arg3: memref<256x1xf32, #tpu.memory_space<vmem>>, %arg4: memref<1x1xf32, #tpu.memory_space<smem>>, %arg5: memref<1x8xf32, #tpu.memory_space<vmem>>) attributes {dimension_semantics = [], scalar_prefetch = 0 : i64, scratch_operands = 0 : i64, tpu.core_type = #tpu.core_type<tc>} {
    %c0 = arith.constant 0 : index
    %c0_0 = arith.constant 0 : index
    %0 = vector.load %arg1[%c0, %c0_0] : memref<256x12xf32, #tpu.memory_space<vmem>>, vector<256x12xf32>
    %c0_1 = arith.constant 0 : index
    %c0_2 = arith.constant 0 : index
    %1 = vector.load %arg0[%c0_1, %c0_2] : memref<12x8xf32, #tpu.memory_space<vmem>>, vector<12x8xf32>
    %cst = arith.constant dense<0.000000e+00> : vector<256x8xf32>
    %2 = tpu.matmul %0, %1, %cst {dimension_numbers = #tpu.dot_dimension_numbers<[1], [0], [0], [1], [0, 0, 1, 1], [], []>} : vector<256x12xf32>, vector<12x8xf32>, vector<256x8xf32> -> vector<256x8xf32>
    %c0_3 = arith.constant 0 : index
    %c0_4 = arith.constant 0 : index
    %3 = vector.load %arg2[%c0_3, %c0_4] : memref<256x1xf32, #tpu.memory_space<vmem>>, vector<256x1xf32>
    %4 = vector.broadcast %3 : vector<256x1xf32> to vector<256x8xf32>
    %5 = arith.addf %2, %4 : vector<256x8xf32>
    %cst_5 = arith.constant 0.000000e+00 : f32
    %6 = vector.broadcast %cst_5 : f32 to vector<256x8xf32>
    %7 = arith.maximumf %5, %6 : vector<256x8xf32>
    %c0_6 = arith.constant 0 : index
    %c0_7 = arith.constant 0 : index
    %8 = vector.load %arg3[%c0_6, %c0_7] : memref<256x1xf32, #tpu.memory_space<vmem>>, vector<256x1xf32>
    %9 = vector.broadcast %8 : vector<256x1xf32> to vector<256x8xf32>
    %10 = arith.mulf %7, %9 : vector<256x8xf32>
    %cst_8 = arith.constant dense<0.000000e+00> : vector<8xf32>
    %11 = vector.multi_reduction <add>, %10, %cst_8 [0] : vector<256x8xf32> to vector<8xf32>
    %12 = vector.shape_cast %11 : vector<8xf32> to vector<1x8xf32>
    %c0_9 = arith.constant 0 : index
    %c0_10 = arith.constant 0 : index
    %13 = memref.load %arg4[%c0_9, %c0_10] : memref<1x1xf32, #tpu.memory_space<smem>>
    %14 = vector.broadcast %13 : f32 to vector<1x8xf32>
    %15 = arith.addf %12, %14 : vector<1x8xf32>
    %16 = math.tanh %15 : vector<1x8xf32>
    %cst_11 = arith.constant 1.275000e+02 : f32
    %17 = vector.broadcast %cst_11 : f32 to vector<1x8xf32>
    %18 = arith.mulf %16, %17 : vector<1x8xf32>
    %cst_12 = arith.constant 1.275000e+02 : f32
    %19 = vector.broadcast %cst_12 : f32 to vector<1x8xf32>
    %20 = arith.addf %18, %19 : vector<1x8xf32>
    %c0_13 = arith.constant 0 : index
    %c0_14 = arith.constant 0 : index
    %21 = vector.load %arg5[%c0_13, %c0_14] : memref<1x8xf32, #tpu.memory_space<vmem>>, vector<1x8xf32>
    tpu.vector_store %arg5[%c0_13, %c0_14], %20 {strides = array<i32>} : memref<1x8xf32, #tpu.memory_space<vmem>>, vector<1x8xf32>,
    return
  }
}

</mosaic_0001>

<llo_original>
// kernel: tpu_custom_call.1
$region0: #{tpu_custom_call.1}
  #allocation0 [shape = 'u32[]', space=smem, size = 0x4, offset = 0x4, fixed_abs, tag = 'smem constant byte address 0x4 - core index']
  #allocation1 [shape = 'u32[144,128]{1,0:T(1,128)}', space=vmem, size = 0x12000, scoped, tag = 'internal scratch']
  #allocation2 [shape = 'f32[1,1]{1,0:T(1,128)S(6)}', space=smem, size = 0x200, scoped, tag = 'scoped memory for tpu_custom_call.1']
  %s0 = inlined_call_operand.vmem [shape: f32[12,8], index: 0, kind: input, shape index: {}]
  %s1 = inlined_call_operand.vmem [shape: f32[256,12], index: 1, kind: input, shape index: {}]
  %s2 = inlined_call_operand.vmem [shape: f32[256,1], index: 2, kind: input, shape index: {}]
  %s3 = inlined_call_operand.vmem [shape: f32[256,1], index: 3, kind: input, shape index: {}]
  %s4 = inlined_call_operand.<no memory space> [shape: f32[1,1], index: 4, kind: input, shape index: {}]
  %s5 = inlined_call_operand.hbm [shape: f32[1,8], index: 5, kind: output, shape index: {}]
  %s6 = sld [smem:[#allocation0]]
  $region30: #{tpu_custom_call.1} parent=0
    _
  %s8 = ssub.s32 1, %s6
  %s9 = scalar_select 0, %s8, %s6
  %10 = sst [smem:[#allocation2]] %s4
  $region1: #{tpu_custom_call.1} parent=0
    #allocation3 [shape = 'u8[512]{0}', space=vmem, size = 0x400, scoped, tag = 'output window, operand 0, single buffered']
    #allocation4 [shape = 's32[1]{0}', space=sflag, size = 0x4, scoped, tag = 'scoped memory for tpu_custom_call.1']
    %11 = vsyncpa [#allocation4], 0
    // Predicated region
    $region2: #{tpu_custom_call.1} parent=1 // pred_check
      _
    $region3: #{tpu_custom_call.1} parent=1 // pred_check_branch
      %13 = sbr.rel (0) target = $region5
    $region4: #{tpu_custom_call.1} parent=1 // pred_region
      _
    $region5: #{tpu_custom_call.1} parent=1 // pred_fallthru
      _
    // Predicated region
    $region6: #{tpu_custom_call.1} parent=1 // pred_check
      _
    $region7: #{tpu_custom_call.1} parent=1 // pred_check_branch
      %15 = sbr.rel (0) target = $region9
    $region8: #{tpu_custom_call.1} parent=1 // pred_region
      _
    $region9: #{tpu_custom_call.1} parent=1 // pred_fallthru
      _
    // Predicated region
    $region10: #{tpu_custom_call.1} parent=1 // pred_check
      _
    $region11: #{tpu_custom_call.1} parent=1 // pred_check_branch
      %17 = sbr.rel (0) target = $region13
    $region12: #{tpu_custom_call.1} parent=1 // pred_region
      _
    $region13: #{tpu_custom_call.1} parent=1 // pred_fallthru
      _
    // Predicated region
    $region14: #{tpu_custom_call.1} parent=1 // pred_check
      _
    $region15: #{tpu_custom_call.1} parent=1 // pred_check_branch
      %19 = sbr.rel (0) target = $region17
    $region16: #{tpu_custom_call.1} parent=1 // pred_region
      _
    $region17: #{tpu_custom_call.1} parent=1 // pred_fallthru
      _
    // Predicated region
    $region18: #{tpu_custom_call.1} parent=1 // pred_check
      _
    $region19: #{tpu_custom_call.1} parent=1 // pred_check_branch
      %21 = sbr.rel (0) target = $region21
    $region20: #{tpu_custom_call.1} parent=1 // pred_region
      _
    $region21: #{tpu_custom_call.1} parent=1 // pred_fallthru
      _
    %v22 = vld [vmem:[%s1] sm:$0xff]
    %v23 = vld [vmem:[%s1 + $0x8] sm:$0xff]
    %v24 = vld [vmem:[%s1 + $0x10] sm:$0xff]
    %v25 = vld [vmem:[%s1 + $0x18] sm:$0xff]
    %v26 = vld [vmem:[%s1 + $0x20] sm:$0xff]
    %v27 = vld [vmem:[%s1 + $0x28] sm:$0xff]
    %v28 = vld [vmem:[%s1 + $0x30] sm:$0xff]
    %v29 = vld [vmem:[%s1 + $0x38] sm:$0xff]
    %v30 = vld [vmem:[%s1 + $0x40] sm:$0xff]
    %v31 = vld [vmem:[%s1 + $0x48] sm:$0xff]
    %v32 = vld [vmem:[%s1 + $0x50] sm:$0xff]
    %v33 = vld [vmem:[%s1 + $0x58] sm:$0xff]
    %v34 = vld [vmem:[%s1 + $0x60] sm:$0xff]
    %v35 = vld [vmem:[%s1 + $0x68] sm:$0xff]
    %v36 = vld [vmem:[%s1 + $0x70] sm:$0xff]
    %v37 = vld [vmem:[%s1 + $0x78] sm:$0xff]
    %v38 = vld [vmem:[%s1 + $0x80] sm:$0xff]
    %v39 = vld [vmem:[%s1 + $0x88] sm:$0xff]
    %v40 = vld [vmem:[%s1 + $0x90] sm:$0xff]
    %v41 = vld [vmem:[%s1 + $0x98] sm:$0xff]
    %v42 = vld [vmem:[%s1 + $0xa0] sm:$0xff]
    %v43 = vld [vmem:[%s1 + $0xa8] sm:$0xff]
    %v44 = vld [vmem:[%s1 + $0xb0] sm:$0xff]
    %v45 = vld [vmem:[%s1 + $0xb8] sm:$0xff]
    %v46 = vld [vmem:[%s1 + $0xc0] sm:$0xff]
    %v47 = vld [vmem:[%s1 + $0xc8] sm:$0xff]
    %v48 = vld [vmem:[%s1 + $0xd0] sm:$0xff]
    %v49 = vld [vmem:[%s1 + $0xd8] sm:$0xff]
    %v50 = vld [vmem:[%s1 + $0xe0] sm:$0xff]
    %v51 = vld [vmem:[%s1 + $0xe8] sm:$0xff]
    %v52 = vld [vmem:[%s1 + $0xf0] sm:$0xff]
    %v53 = vld [vmem:[%s1 + $0xf8] sm:$0xff]
    %v54 = vld [vmem:[%s0] sm:$0xff]
    %v55 = vld [vmem:[%s0 + $0x8] sm:$0xf]
    %v56 = vld [vmem:[%s2] sm:$0xff]
    %v57 = vld [vmem:[%s2 + $0x8] sm:$0xff]
    %v58 = vld [vmem:[%s2 + $0x10] sm:$0xff]
    %v59 = vld [vmem:[%s2 + $0x18] sm:$0xff]
    %v60 = vld [vmem:[%s2 + $0x20] sm:$0xff]
    %v61 = vld [vmem:[%s2 + $0x28] sm:$0xff]
    %v62 = vld [vmem:[%s2 + $0x30] sm:$0xff]
    %v63 = vld [vmem:[%s2 + $0x38] sm:$0xff]
    %v64 = vld [vmem:[%s2 + $0x40] sm:$0xff]
    %v65 = vld [vmem:[%s2 + $0x48] sm:$0xff]
    %v66 = vld [vmem:[%s2 + $0x50] sm:$0xff]
    %v67 = vld [vmem:[%s2 + $0x58] sm:$0xff]
    %v68 = vld [vmem:[%s2 + $0x60] sm:$0xff]
    %v69 = vld [vmem:[%s2 + $0x68] sm:$0xff]
    %v70 = vld [vmem:[%s2 + $0x70] sm:$0xff]
    %v71 = vld [vmem:[%s2 + $0x78] sm:$0xff]
    %v72 = vld [vmem:[%s2 + $0x80] sm:$0xff]
    %v73 = vld [vmem:[%s2 + $0x88] sm:$0xff]
    %v74 = vld [vmem:[%s2 + $0x90] sm:$0xff]
    %v75 = vld [vmem:[%s2 + $0x98] sm:$0xff]
    %v76 = vld [vmem:[%s2 + $0xa0] sm:$0xff]
    %v77 = vld [vmem:[%s2 + $0xa8] sm:$0xff]
    %v78 = vld [vmem:[%s2 + $0xb0] sm:$0xff]
    %v79 = vld [vmem:[%s2 + $0xb8] sm:$0xff]
    %v80 = vld [vmem:[%s2 + $0xc0] sm:$0xff]
    %v81 = vld [vmem:[%s2 + $0xc8] sm:$0xff]
    %v82 = vld [vmem:[%s2 + $0xd0] sm:$0xff]
    %v83 = vld [vmem:[%s2 + $0xd8] sm:$0xff]
    %v84 = vld [vmem:[%s2 + $0xe0] sm:$0xff]
    %v85 = vld [vmem:[%s2 + $0xe8] sm:$0xff]
    %v86 = vld [vmem:[%s2 + $0xf0] sm:$0xff]
    %v87 = vld [vmem:[%s2 + $0xf8] sm:$0xff]
    %89 = vset.pattern.permute.xlu0 0
    %90 = vperm.xlu0 %89, %v56
    %v91 = vpop.permute.xlu0 %90
    %94 = vset.pattern.permute.xlu0 0
    %95 = vperm.xlu0 %94, %v57
    %v96 = vpop.permute.xlu0 %95
    %99 = vset.pattern.permute.xlu0 0
    %100 = vperm.xlu0 %99, %v58
    %v101 = vpop.permute.xlu0 %100
    %104 = vset.pattern.permute.xlu0 0
    %105 = vperm.xlu0 %104, %v59
    %v106 = vpop.permute.xlu0 %105
    %109 = vset.pattern.permute.xlu0 0
    %110 = vperm.xlu0 %109, %v60
    %v111 = vpop.permute.xlu0 %110
    %114 = vset.pattern.permute.xlu0 0
    %115 = vperm.xlu0 %114, %v61
    %v116 = vpop.permute.xlu0 %115
    %119 = vset.pattern.permute.xlu0 0
    %120 = vperm.xlu0 %119, %v62
    %v121 = vpop.permute.xlu0 %120
    %124 = vset.pattern.permute.xlu0 0
    %125 = vperm.xlu0 %124, %v63
    %v126 = vpop.permute.xlu0 %125
    %129 = vset.pattern.permute.xlu0 0
    %130 = vperm.xlu0 %129, %v64
    %v131 = vpop.permute.xlu0 %130
    %134 = vset.pattern.permute.xlu0 0
    %135 = vperm.xlu0 %134, %v65
    %v136 = vpop.permute.xlu0 %135
    %139 = vset.pattern.permute.xlu0 0
    %140 = vperm.xlu0 %139, %v66
    %v141 = vpop.permute.xlu0 %140
    %144 = vset.pattern.permute.xlu0 0
    %145 = vperm.xlu0 %144, %v67
    %v146 = vpop.permute.xlu0 %145
    %149 = vset.pattern.permute.xlu0 0
    %150 = vperm.xlu0 %149, %v68
    %v151 = vpop.permute.xlu0 %150
    %154 = vset.pattern.permute.xlu0 0
    %155 = vperm.xlu0 %154, %v69
    %v156 = vpop.permute.xlu0 %155
    %159 = vset.pattern.permute.xlu0 0
    %160 = vperm.xlu0 %159, %v70
    %v161 = vpop.permute.xlu0 %160
    %164 = vset.pattern.permute.xlu0 0
    %165 = vperm.xlu0 %164, %v71
    %v166 = vpop.permute.xlu0 %165
    %169 = vset.pattern.permute.xlu0 0
    %170 = vperm.xlu0 %169, %v72
    %v171 = vpop.permute.xlu0 %170
    %174 = vset.pattern.permute.xlu0 0
    %175 = vperm.xlu0 %174, %v73
    %v176 = vpop.permute.xlu0 %175
    %179 = vset.pattern.permute.xlu0 0
    %180 = vperm.xlu0 %179, %v74
    %v181 = vpop.permute.xlu0 %180
    %184 = vset.pattern.permute.xlu0 0
    %185 = vperm.xlu0 %184, %v75
    %v186 = vpop.permute.xlu0 %185
    %189 = vset.pattern.permute.xlu0 0
    %190 = vperm.xlu0 %189, %v76
    %v191 = vpop.permute.xlu0 %190
    %194 = vset.pattern.permute.xlu0 0
    %195 = vperm.xlu0 %194, %v77
    %v196 = vpop.permute.xlu0 %195
    %199 = vset.pattern.permute.xlu0 0
    %200 = vperm.xlu0 %199, %v78
    %v201 = vpop.permute.xlu0 %200
    %204 = vset.pattern.permute.xlu0 0
    %205 = vperm.xlu0 %204, %v79
    %v206 = vpop.permute.xlu0 %205
    %209 = vset.pattern.permute.xlu0 0
    %210 = vperm.xlu0 %209, %v80
    %v211 = vpop.permute.xlu0 %210
    %214 = vset.pattern.permute.xlu0 0
    %215 = vperm.xlu0 %214, %v81
    %v216 = vpop.permute.xlu0 %215
    %219 = vset.pattern.permute.xlu0 0
    %220 = vperm.xlu0 %219, %v82
    %v221 = vpop.permute.xlu0 %220
    %224 = vset.pattern.permute.xlu0 0
    %225 = vperm.xlu0 %224, %v83
    %v226 = vpop.permute.xlu0 %225
    %229 = vset.pattern.permute.xlu0 0
    %230 = vperm.xlu0 %229, %v84
    %v231 = vpop.permute.xlu0 %230
    %234 = vset.pattern.permute.xlu0 0
    %235 = vperm.xlu0 %234, %v85
    %v236 = vpop.permute.xlu0 %235
    %239 = vset.pattern.permute.xlu0 0
    %240 = vperm.xlu0 %239, %v86
    %v241 = vpop.permute.xlu0 %240
    %244 = vset.pattern.permute.xlu0 0
    %245 = vperm.xlu0 %244, %v87
    %v246 = vpop.permute.xlu0 %245
    %vm248 = vcmask 97280
    %v250 = vsel %vm248, %v22, 0
    %v253 = vsel %vm248, %v23, 0
    %v256 = vsel %vm248, %v24, 0
    %v259 = vsel %vm248, %v25, 0
    %v262 = vsel %vm248, %v26, 0
    %v265 = vsel %vm248, %v27, 0
    %v268 = vsel %vm248, %v28, 0
    %v271 = vsel %vm248, %v29, 0
    %v274 = vsel %vm248, %v30, 0
    %v277 = vsel %vm248, %v31, 0
    %v280 = vsel %vm248, %v32, 0
    %v283 = vsel %vm248, %v33, 0
    %v286 = vsel %vm248, %v34, 0
    %v289 = vsel %vm248, %v35, 0
    %v292 = vsel %vm248, %v36, 0
    %v295 = vsel %vm248, %v37, 0
    %v298 = vsel %vm248, %v38, 0
    %v301 = vsel %vm248, %v39, 0
    %v304 = vsel %vm248, %v40, 0
    %v307 = vsel %vm248, %v41, 0
    %v310 = vsel %vm248, %v42, 0
    %v313 = vsel %vm248, %v43, 0
    %v316 = vsel %vm248, %v44, 0
    %v319 = vsel %vm248, %v45, 0
    %v322 = vsel %vm248, %v46, 0
    %v325 = vsel %vm248, %v47, 0
    %v328 = vsel %vm248, %v48, 0
    %v331 = vsel %vm248, %v49, 0
    %v334 = vsel %vm248, %v50, 0
    %v337 = vsel %vm248, %v51, 0
    %v340 = vsel %vm248, %v52, 0
    %v343 = vsel %vm248, %v53, 0
    %vm345 = vcmask 1043456
    %v347 = vsel %vm345, %v55, 0
    %349 = vmatprep.subr.mxu0 0.0
    %350 = vmatpush1.msra.mxu0 %v54
    %351 = vmatprep.subr.mxu0 0.0
    %352 = vmatpush1.msra.mxu0 %v347
    %353 = vmatprep.subr.mxu0 0.0
    %354 = vmatpush1.msra.mxu0 0.0
    %355 = vmatprep.subr.mxu0 0.0
    %356 = vmatpush1.msra.mxu0 0.0
    %357 = vmatprep.subr.mxu0 0.0
    %358 = vmatpush1.msra.mxu0 0.0
    %359 = vmatprep.subr.mxu0 0.0
    %360 = vmatpush1.msra.mxu0 0.0
    %361 = vmatprep.subr.mxu0 0.0
    %362 = vmatpush1.msra.mxu0 0.0
    %363 = vmatprep.subr.mxu0 0.0
    %364 = vmatpush1.msra.mxu0 0.0
    %365 = vmatprep.subr.mxu0 0.0
    %366 = vmatpush1.msra.mxu0 0.0
    %367 = vmatprep.subr.mxu0 0.0
    %368 = vmatpush1.msra.mxu0 0.0
    %369 = vmatprep.subr.mxu0 0.0
    %370 = vmatpush1.msra.mxu0 0.0
    %371 = vmatprep.subr.mxu0 0.0
    %372 = vmatpush1.msra.mxu0 0.0
    %373 = vmatprep.subr.mxu0 0.0
    %374 = vmatpush1.msra.mxu0 0.0
    %375 = vmatprep.subr.mxu0 0.0
    %376 = vmatpush1.msra.mxu0 0.0
    %377 = vmatprep.subr.mxu0 0.0
    %378 = vmatpush1.msra.mxu0 0.0
    %379 = vmatprep.subr.mxu0 0.0
    %380 = vmatpush1.msra.mxu0 0.0
    %381 = vmatprep.subr.mxu0 0.0
    %382 = vmatpush1.msra.mxu0 0.0
    %383 = vmatprep.subr.mxu0 0.0
    %384 = vmatpush1.msra.mxu0 0.0
    %385 = vmatprep.subr.mxu0 0.0
    %386 = vmatpush1.msra.mxu0 0.0
    %387 = vmatprep.subr.mxu0 0.0
    %388 = vmatpush1.msra.mxu0 0.0
    %389 = vmatprep.subr.mxu0 0.0
    %390 = vmatpush1.msra.mxu0 0.0
    %391 = vmatprep.subr.mxu0 0.0
    %392 = vmatpush1.msra.mxu0 0.0
    %393 = vmatprep.subr.mxu0 0.0
    %394 = vmatpush1.msra.mxu0 0.0
    %395 = vmatprep.subr.mxu0 0.0
    %396 = vmatpush1.msra.mxu0 0.0
    %397 = vmatprep.subr.mxu0 0.0
    %398 = vmatpush1.msra.mxu0 0.0
    %399 = vmatprep.subr.mxu0 0.0
    %400 = vmatpush1.msra.mxu0 0.0
    %401 = vmatprep.subr.mxu0 0.0
    %402 = vmatpush1.msra.mxu0 0.0
    %403 = vmatprep.subr.mxu0 0.0
    %404 = vmatpush1.msra.mxu0 0.0
    %405 = vmatprep.subr.mxu0 0.0
    %406 = vmatpush1.msra.mxu0 0.0
    %407 = vmatprep.subr.mxu0 0.0
    %408 = vmatpush1.msra.mxu0 0.0
    %409 = vmatprep.subr.mxu0 0.0
    %410 = vmatpush1.msra.mxu0 0.0
    %411 = vmatprep.subr.mxu0 0.0
    %412 = vmatpush1.msra.mxu0 0.0
    %413 = vmatprep.mubr.f32.mxu0 0.0
    %414 = vmatmul.mubr.f32.gmra.mrb[0].mxu0 %v250
    %v415 = vpop.f32.mrb[0].mxu0
    %v416 = vadd.f32 %v91, %v415
    %v417 = vpop.f32.mrb[0].mxu0
    %418 = vmatprep.mubr.f32.mxu0 0.0
    %419 = vmatmul.mubr.f32.gmra.mrb[0].mxu0 %v253
    %v420 = vpop.f32.mrb[0].mxu0
    %v421 = vadd.f32 %v96, %v420
    %v422 = vpop.f32.mrb[0].mxu0
    %423 = vmatprep.mubr.f32.mxu0 0.0
    %424 = vmatmul.mubr.f32.gmra.mrb[0].mxu0 %v256
    %v425 = vpop.f32.mrb[0].mxu0
    %v426 = vadd.f32 %v101, %v425
    %v427 = vpop.f32.mrb[0].mxu0
    %428 = vmatprep.mubr.f32.mxu0 0.0
    %429 = vmatmul.mubr.f32.gmra.mrb[0].mxu0 %v259
    %v430 = vpop.f32.mrb[0].mxu0
    %v431 = vadd.f32 %v106, %v430
    %v432 = vpop.f32.mrb[0].mxu0
    %433 = vmatprep.mubr.f32.mxu0 0.0
    %434 = vmatmul.mubr.f32.gmra.mrb[0].mxu0 %v262
    %v435 = vpop.f32.mrb[0].mxu0
    %v436 = vadd.f32 %v111, %v435
    %v437 = vpop.f32.mrb[0].mxu0
    %438 = vmatprep.mubr.f32.mxu0 0.0
    %439 = vmatmul.mubr.f32.gmra.mrb[0].mxu0 %v265
    %v440 = vpop.f32.mrb[0].mxu0
    %v441 = vadd.f32 %v116, %v440
    %v442 = vpop.f32.mrb[0].mxu0
    %443 = vmatprep.mubr.f32.mxu0 0.0
    %444 = vmatmul.mubr.f32.gmra.mrb[0].mxu0 %v268
    %v445 = vpop.f32.mrb[0].mxu0
    %v446 = vadd.f32 %v121, %v445
    %v447 = vpop.f32.mrb[0].mxu0
    %448 = vmatprep.mubr.f32.mxu0 0.0
    %449 = vmatmul.mubr.f32.gmra.mrb[0].mxu0 %v271
    %v450 = vpop.f32.mrb[0].mxu0
    %v451 = vadd.f32 %v126, %v450
    %v452 = vpop.f32.mrb[0].mxu0
    %453 = vmatprep.mubr.f32.mxu0 0.0
    %454 = vmatmul.mubr.f32.gmra.mrb[0].mxu0 %v274
    %v455 = vpop.f32.mrb[0].mxu0
    %v456 = vadd.f32 %v131, %v455
    %v457 = vpop.f32.mrb[0].mxu0
    %458 = vmatprep.mubr.f32.mxu0 0.0
    %459 = vmatmul.mubr.f32.gmra.mrb[0].mxu0 %v277
    %v460 = vpop.f32.mrb[0].mxu0
    %v461 = vadd.f32 %v136, %v460
    %v462 = vpop.f32.mrb[0].mxu0
    %463 = vmatprep.mubr.f32.mxu0 0.0
    %464 = vmatmul.mubr.f32.gmra.mrb[0].mxu0 %v280
    %v465 = vpop.f32.mrb[0].mxu0
    %v466 = vadd.f32 %v141, %v465
    %v467 = vpop.f32.mrb[0].mxu0
    %468 = vmatprep.mubr.f32.mxu0 0.0
    %469 = vmatmul.mubr.f32.gmra.mrb[0].mxu0 %v283
    %v470 = vpop.f32.mrb[0].mxu0
    %v471 = vadd.f32 %v146, %v470
    %v472 = vpop.f32.mrb[0].mxu0
    %473 = vmatprep.mubr.f32.mxu0 0.0
    %474 = vmatmul.mubr.f32.gmra.mrb[0].mxu0 %v286
    %v475 = vpop.f32.mrb[0].mxu0
    %v476 = vadd.f32 %v151, %v475
    %v477 = vpop.f32.mrb[0].mxu0
    %478 = vmatprep.mubr.f32.mxu0 0.0
    %479 = vmatmul.mubr.f32.gmra.mrb[0].mxu0 %v289
    %v480 = vpop.f32.mrb[0].mxu0
    %v481 = vadd.f32 %v156, %v480
    %v482 = vpop.f32.mrb[0].mxu0
    %483 = vmatprep.mubr.f32.mxu0 0.0
    %484 = vmatmul.mubr.f32.gmra.mrb[0].mxu0 %v292
    %v485 = vpop.f32.mrb[0].mxu0
    %v486 = vadd.f32 %v161, %v485
    %v487 = vpop.f32.mrb[0].mxu0
    %488 = vmatprep.mubr.f32.mxu0 0.0
    %489 = vmatmul.mubr.f32.gmra.mrb[0].mxu0 %v295
    %v490 = vpop.f32.mrb[0].mxu0
    %v491 = vadd.f32 %v166, %v490
    %v492 = vpop.f32.mrb[0].mxu0
    %493 = vmatprep.mubr.f32.mxu0 0.0
    %494 = vmatmul.mubr.f32.gmra.mrb[0].mxu0 %v298
    %v495 = vpop.f32.mrb[0].mxu0
    %v496 = vadd.f32 %v171, %v495
    %v497 = vpop.f32.mrb[0].mxu0
    %498 = vmatprep.mubr.f32.mxu0 0.0
    %499 = vmatmul.mubr.f32.gmra.mrb[0].mxu0 %v301
    %v500 = vpop.f32.mrb[0].mxu0
    %v501 = vadd.f32 %v176, %v500
    %v502 = vpop.f32.mrb[0].mxu0
    %503 = vmatprep.mubr.f32.mxu0 0.0
    %504 = vmatmul.mubr.f32.gmra.mrb[0].mxu0 %v304
    %v505 = vpop.f32.mrb[0].mxu0
    %v506 = vadd.f32 %v181, %v505
    %v507 = vpop.f32.mrb[0].mxu0
    %508 = vmatprep.mubr.f32.mxu0 0.0
    %509 = vmatmul.mubr.f32.gmra.mrb[0].mxu0 %v307
    %v510 = vpop.f32.mrb[0].mxu0
    %v511 = vadd.f32 %v186, %v510
    %v512 = vpop.f32.mrb[0].mxu0
    %513 = vmatprep.mubr.f32.mxu0 0.0
    %514 = vmatmul.mubr.f32.gmra.mrb[0].mxu0 %v310
    %v515 = vpop.f32.mrb[0].mxu0
    %v516 = vadd.f32 %v191, %v515
    %v517 = vpop.f32.mrb[0].mxu0
    %518 = vmatprep.mubr.f32.mxu0 0.0
    %519 = vmatmul.mubr.f32.gmra.mrb[0].mxu0 %v313
    %v520 = vpop.f32.mrb[0].mxu0
    %v521 = vadd.f32 %v196, %v520
    %v522 = vpop.f32.mrb[0].mxu0
    %523 = vmatprep.mubr.f32.mxu0 0.0
    %524 = vmatmul.mubr.f32.gmra.mrb[0].mxu0 %v316
    %v525 = vpop.f32.mrb[0].mxu0
    %v526 = vadd.f32 %v201, %v525
    %v527 = vpop.f32.mrb[0].mxu0
    %528 = vmatprep.mubr.f32.mxu0 0.0
    %529 = vmatmul.mubr.f32.gmra.mrb[0].mxu0 %v319
    %v530 = vpop.f32.mrb[0].mxu0
    %v531 = vadd.f32 %v206, %v530
    %v532 = vpop.f32.mrb[0].mxu0
    %533 = vmatprep.mubr.f32.mxu0 0.0
    %534 = vmatmul.mubr.f32.gmra.mrb[0].mxu0 %v322
    %v535 = vpop.f32.mrb[0].mxu0
    %v536 = vadd.f32 %v211, %v535
    %v537 = vpop.f32.mrb[0].mxu0
    %538 = vmatprep.mubr.f32.mxu0 0.0
    %539 = vmatmul.mubr.f32.gmra.mrb[0].mxu0 %v325
    %v540 = vpop.f32.mrb[0].mxu0
    %v541 = vadd.f32 %v216, %v540
    %v542 = vpop.f32.mrb[0].mxu0
    %543 = vmatprep.mubr.f32.mxu0 0.0
    %544 = vmatmul.mubr.f32.gmra.mrb[0].mxu0 %v328
    %v545 = vpop.f32.mrb[0].mxu0
    %v546 = vadd.f32 %v221, %v545
    %v547 = vpop.f32.mrb[0].mxu0
    %548 = vmatprep.mubr.f32.mxu0 0.0
    %549 = vmatmul.mubr.f32.gmra.mrb[0].mxu0 %v331
    %v550 = vpop.f32.mrb[0].mxu0
    %v551 = vadd.f32 %v226, %v550
    %v552 = vpop.f32.mrb[0].mxu0
    %553 = vmatprep.mubr.f32.mxu0 0.0
    %554 = vmatmul.mubr.f32.gmra.mrb[0].mxu0 %v334
    %v555 = vpop.f32.mrb[0].mxu0
    %v556 = vadd.f32 %v231, %v555
    %v557 = vpop.f32.mrb[0].mxu0
    %558 = vmatprep.mubr.f32.mxu0 0.0
    %559 = vmatmul.mubr.f32.gmra.mrb[0].mxu0 %v337
    %v560 = vpop.f32.mrb[0].mxu0
    %v561 = vadd.f32 %v236, %v560
    %v562 = vpop.f32.mrb[0].mxu0
    %563 = vmatprep.mubr.f32.mxu0 0.0
    %564 = vmatmul.mubr.f32.gmra.mrb[0].mxu0 %v340
    %v565 = vpop.f32.mrb[0].mxu0
    %v566 = vadd.f32 %v241, %v565
    %v567 = vpop.f32.mrb[0].mxu0
    %568 = vmatprep.mubr.f32.mxu0 0.0
    %569 = vmatmul.mubr.f32.gmra.mrb[0].mxu0 %v343
    %v570 = vpop.f32.mrb[0].mxu0
    %v571 = vadd.f32 %v246, %v570
    %v572 = vpop.f32.mrb[0].mxu0
    %573 = vdwg.mxu0
    %v574 = vmax.f32 %v416, 0.0
    %v575 = vmax.f32 %v421, 0.0
    %v576 = vmax.f32 %v426, 0.0
    %v577 = vmax.f32 %v431, 0.0
    %v578 = vmax.f32 %v436, 0.0
    %v579 = vmax.f32 %v441, 0.0
    %v580 = vmax.f32 %v446, 0.0
    %v581 = vmax.f32 %v451, 0.0
    %v582 = vmax.f32 %v456, 0.0
    %v583 = vmax.f32 %v461, 0.0
    %v584 = vmax.f32 %v466, 0.0
    %v585 = vmax.f32 %v471, 0.0
    %v586 = vmax.f32 %v476, 0.0
    %v587 = vmax.f32 %v481, 0.0
    %v588 = vmax.f32 %v486, 0.0
    %v589 = vmax.f32 %v491, 0.0
    %v590 = vmax.f32 %v496, 0.0
    %v591 = vmax.f32 %v501, 0.0
    %v592 = vmax.f32 %v506, 0.0
    %v593 = vmax.f32 %v511, 0.0
    %v594 = vmax.f32 %v516, 0.0
    %v595 = vmax.f32 %v521, 0.0
    %v596 = vmax.f32 %v526, 0.0
    %v597 = vmax.f32 %v531, 0.0
    %v598 = vmax.f32 %v536, 0.0
    %v599 = vmax.f32 %v541, 0.0
    %v600 = vmax.f32 %v546, 0.0
    %v601 = vmax.f32 %v551, 0.0
    %v602 = vmax.f32 %v556, 0.0
    %v603 = vmax.f32 %v561, 0.0
    %v604 = vmax.f32 %v566, 0.0
    %v605 = vmax.f32 %v571, 0.0
    %v606 = vld [vmem:[%s3] sm:$0xff]
    %v607 = vld [vmem:[%s3 + $0x8] sm:$0xff]
    %v608 = vld [vmem:[%s3 + $0x10] sm:$0xff]
    %v609 = vld [vmem:[%s3 + $0x18] sm:$0xff]
    %v610 = vld [vmem:[%s3 + $0x20] sm:$0xff]
    %v611 = vld [vmem:[%s3 + $0x28] sm:$0xff]
    %v612 = vld [vmem:[%s3 + $0x30] sm:$0xff]
    %v613 = vld [vmem:[%s3 + $0x38] sm:$0xff]
    %v614 = vld [vmem:[%s3 + $0x40] sm:$0xff]
    %v615 = vld [vmem:[%s3 + $0x48] sm:$0xff]
    %v616 = vld [vmem:[%s3 + $0x50] sm:$0xff]
    %v617 = vld [vmem:[%s3 + $0x58] sm:$0xff]
    %v618 = vld [vmem:[%s3 + $0x60] sm:$0xff]
    %v619 = vld [vmem:[%s3 + $0x68] sm:$0xff]
    %v620 = vld [vmem:[%s3 + $0x70] sm:$0xff]
    %v621 = vld [vmem:[%s3 + $0x78] sm:$0xff]
    %v622 = vld [vmem:[%s3 + $0x80] sm:$0xff]
    %v623 = vld [vmem:[%s3 + $0x88] sm:$0xff]
    %v624 = vld [vmem:[%s3 + $0x90] sm:$0xff]
    %v625 = vld [vmem:[%s3 + $0x98] sm:$0xff]
    %v626 = vld [vmem:[%s3 + $0xa0] sm:$0xff]
    %v627 = vld [vmem:[%s3 + $0xa8] sm:$0xff]
    %v628 = vld [vmem:[%s3 + $0xb0] sm:$0xff]
    %v629 = vld [vmem:[%s3 + $0xb8] sm:$0xff]
    %v630 = vld [vmem:[%s3 + $0xc0] sm:$0xff]
    %v631 = vld [vmem:[%s3 + $0xc8] sm:$0xff]
    %v632 = vld [vmem:[%s3 + $0xd0] sm:$0xff]
    %v633 = vld [vmem:[%s3 + $0xd8] sm:$0xff]
    %v634 = vld [vmem:[%s3 + $0xe0] sm:$0xff]
    %v635 = vld [vmem:[%s3 + $0xe8] sm:$0xff]
    %v636 = vld [vmem:[%s3 + $0xf0] sm:$0xff]
    %v637 = vld [vmem:[%s3 + $0xf8] sm:$0xff]
    %639 = vset.pattern.permute.xlu0 0
    %640 = vperm.xlu0 %639, %v606
    %v641 = vpop.permute.xlu0 %640
    %644 = vset.pattern.permute.xlu0 0
    %645 = vperm.xlu0 %644, %v607
    %v646 = vpop.permute.xlu0 %645
    %649 = vset.pattern.permute.xlu0 0
    %650 = vperm.xlu0 %649, %v608
    %v651 = vpop.permute.xlu0 %650
    %654 = vset.pattern.permute.xlu0 0
    %655 = vperm.xlu0 %654, %v609
    %v656 = vpop.permute.xlu0 %655
    %659 = vset.pattern.permute.xlu0 0
    %660 = vperm.xlu0 %659, %v610
    %v661 = vpop.permute.xlu0 %660
    %664 = vset.pattern.permute.xlu0 0
    %665 = vperm.xlu0 %664, %v611
    %v666 = vpop.permute.xlu0 %665
    %669 = vset.pattern.permute.xlu0 0
    %670 = vperm.xlu0 %669, %v612
    %v671 = vpop.permute.xlu0 %670
    %674 = vset.pattern.permute.xlu0 0
    %675 = vperm.xlu0 %674, %v613
    %v676 = vpop.permute.xlu0 %675
    %679 = vset.pattern.permute.xlu0 0
    %680 = vperm.xlu0 %679, %v614
    %v681 = vpop.permute.xlu0 %680
    %684 = vset.pattern.permute.xlu0 0
    %685 = vperm.xlu0 %684, %v615
    %v686 = vpop.permute.xlu0 %685
    %689 = vset.pattern.permute.xlu0 0
    %690 = vperm.xlu0 %689, %v616
    %v691 = vpop.permute.xlu0 %690
    %694 = vset.pattern.permute.xlu0 0
    %695 = vperm.xlu0 %694, %v617
    %v696 = vpop.permute.xlu0 %695
    %699 = vset.pattern.permute.xlu0 0
    %700 = vperm.xlu0 %699, %v618
    %v701 = vpop.permute.xlu0 %700
    %704 = vset.pattern.permute.xlu0 0
    %705 = vperm.xlu0 %704, %v619
    %v706 = vpop.permute.xlu0 %705
    %709 = vset.pattern.permute.xlu0 0
    %710 = vperm.xlu0 %709, %v620
    %v711 = vpop.permute.xlu0 %710
    %714 = vset.pattern.permute.xlu0 0
    %715 = vperm.xlu0 %714, %v621
    %v716 = vpop.permute.xlu0 %715
    %719 = vset.pattern.permute.xlu0 0
    %720 = vperm.xlu0 %719, %v622
    %v721 = vpop.permute.xlu0 %720
    %724 = vset.pattern.permute.xlu0 0
    %725 = vperm.xlu0 %724, %v623
    %v726 = vpop.permute.xlu0 %725
    %729 = vset.pattern.permute.xlu0 0
    %730 = vperm.xlu0 %729, %v624
    %v731 = vpop.permute.xlu0 %730
    %734 = vset.pattern.permute.xlu0 0
    %735 = vperm.xlu0 %734, %v625
    %v736 = vpop.permute.xlu0 %735
    %739 = vset.pattern.permute.xlu0 0
    %740 = vperm.xlu0 %739, %v626
    %v741 = vpop.permute.xlu0 %740
    %744 = vset.pattern.permute.xlu0 0
    %745 = vperm.xlu0 %744, %v627
    %v746 = vpop.permute.xlu0 %745
    %749 = vset.pattern.permute.xlu0 0
    %750 = vperm.xlu0 %749, %v628
    %v751 = vpop.permute.xlu0 %750
    %754 = vset.pattern.permute.xlu0 0
    %755 = vperm.xlu0 %754, %v629
    %v756 = vpop.permute.xlu0 %755
    %759 = vset.pattern.permute.xlu0 0
    %760 = vperm.xlu0 %759, %v630
    %v761 = vpop.permute.xlu0 %760
    %764 = vset.pattern.permute.xlu0 0
    %765 = vperm.xlu0 %764, %v631
    %v766 = vpop.permute.xlu0 %765
    %769 = vset.pattern.permute.xlu0 0
    %770 = vperm.xlu0 %769, %v632
    %v771 = vpop.permute.xlu0 %770
    %774 = vset.pattern.permute.xlu0 0
    %775 = vperm.xlu0 %774, %v633
    %v776 = vpop.permute.xlu0 %775
    %779 = vset.pattern.permute.xlu0 0
    %780 = vperm.xlu0 %779, %v634
    %v781 = vpop.permute.xlu0 %780
    %784 = vset.pattern.permute.xlu0 0
    %785 = vperm.xlu0 %784, %v635
    %v786 = vpop.permute.xlu0 %785
    %789 = vset.pattern.permute.xlu0 0
    %790 = vperm.xlu0 %789, %v636
    %v791 = vpop.permute.xlu0 %790
    %794 = vset.pattern.permute.xlu0 0
    %795 = vperm.xlu0 %794, %v637
    %v796 = vpop.permute.xlu0 %795
    %v798 = vmul.f32 %v574, %v641
    %v799 = vmul.f32 %v575, %v646
    %v800 = vmul.f32 %v576, %v651
    %v801 = vmul.f32 %v577, %v656
    %v802 = vmul.f32 %v578, %v661
    %v803 = vmul.f32 %v579, %v666
    %v804 = vmul.f32 %v580, %v671
    %v805 = vmul.f32 %v581, %v676
    %v806 = vmul.f32 %v582, %v681
    %v807 = vmul.f32 %v583, %v686
    %v808 = vmul.f32 %v584, %v691
    %v809 = vmul.f32 %v585, %v696
    %v810 = vmul.f32 %v586, %v701
    %v811 = vmul.f32 %v587, %v706
    %v812 = vmul.f32 %v588, %v711
    %v813 = vmul.f32 %v589, %v716
    %v814 = vmul.f32 %v590, %v721
    %v815 = vmul.f32 %v591, %v726
    %v816 = vmul.f32 %v592, %v731
    %v817 = vmul.f32 %v593, %v736
    %v818 = vmul.f32 %v594, %v741
    %v819 = vmul.f32 %v595, %v746
    %v820 = vmul.f32 %v596, %v751
    %v821 = vmul.f32 %v597, %v756
    %v822 = vmul.f32 %v598, %v761
    %v823 = vmul.f32 %v599, %v766
    %v824 = vmul.f32 %v600, %v771
    %v825 = vmul.f32 %v601, %v776
    %v826 = vmul.f32 %v602, %v781
    %v827 = vmul.f32 %v603, %v786
    %v828 = vmul.f32 %v604, %v791
    %v829 = vmul.f32 %v605, %v796
    %vm830 = vcmask 64512
    %v831 = vsel %vm830, %v798, 0.0
    %v832 = vsel %vm830, %v799, 0.0
    %v833 = vadd.f32 %v831, %v832
    %v834 = vsel %vm830, %v800, 0.0
    %v835 = vadd.f32 %v833, %v834
    %v836 = vsel %vm830, %v801, 0.0
    %v837 = vadd.f32 %v835, %v836
    %v838 = vsel %vm830, %v802, 0.0
    %v839 = vadd.f32 %v837, %v838
    %v840 = vsel %vm830, %v803, 0.0
    %v841 = vadd.f32 %v839, %v840
    %v842 = vsel %vm830, %v804, 0.0
    %v843 = vadd.f32 %v841, %v842
    %v844 = vsel %vm830, %v805, 0.0
    %v845 = vadd.f32 %v843, %v844
    %v846 = vsel %vm830, %v806, 0.0
    %v847 = vadd.f32 %v845, %v846
    %v848 = vsel %vm830, %v807, 0.0
    %v849 = vadd.f32 %v847, %v848
    %v850 = vsel %vm830, %v808, 0.0
    %v851 = vadd.f32 %v849, %v850
    %v852 = vsel %vm830, %v809, 0.0
    %v853 = vadd.f32 %v851, %v852
    %v854 = vsel %vm830, %v810, 0.0
    %v855 = vadd.f32 %v853, %v854
    %v856 = vsel %vm830, %v811, 0.0
    %v857 = vadd.f32 %v855, %v856
    %v858 = vsel %vm830, %v812, 0.0
    %v859 = vadd.f32 %v857, %v858
    %v860 = vsel %vm830, %v813, 0.0
    %v861 = vadd.f32 %v859, %v860
    %v862 = vsel %vm830, %v814, 0.0
    %v863 = vadd.f32 %v861, %v862
    %v864 = vsel %vm830, %v815, 0.0
    %v865 = vadd.f32 %v863, %v864
    %v866 = vsel %vm830, %v816, 0.0
    %v867 = vadd.f32 %v865, %v866
    %v868 = vsel %vm830, %v817, 0.0
    %v869 = vadd.f32 %v867, %v868
    %v870 = vsel %vm830, %v818, 0.0
    %v871 = vadd.f32 %v869, %v870
    %v872 = vsel %vm830, %v819, 0.0
    %v873 = vadd.f32 %v871, %v872
    %v874 = vsel %vm830, %v820, 0.0
    %v875 = vadd.f32 %v873, %v874
    %v876 = vsel %vm830, %v821, 0.0
    %v877 = vadd.f32 %v875, %v876
    %v878 = vsel %vm830, %v822, 0.0
    %v879 = vadd.f32 %v877, %v878
    %v880 = vsel %vm830, %v823, 0.0
    %v881 = vadd.f32 %v879, %v880
    %v882 = vsel %vm830, %v824, 0.0
    %v883 = vadd.f32 %v881, %v882
    %v884 = vsel %vm830, %v825, 0.0
    %v885 = vadd.f32 %v883, %v884
    %v886 = vsel %vm830, %v826, 0.0
    %v887 = vadd.f32 %v885, %v886
    %v888 = vsel %vm830, %v827, 0.0
    %v889 = vadd.f32 %v887, %v888
    %v890 = vsel %vm830, %v828, 0.0
    %v891 = vadd.f32 %v889, %v890
    %v892 = vsel %vm830, %v829, 0.0
    %v893 = vadd.f32 %v891, %v892
    %v894 = vrot.slane %v893, 4
    %v895 = vadd.f32 %v893, %v894
    %v896 = vrot.slane %v895, 2
    %v897 = vadd.f32 %v895, %v896
    %v898 = vrot.slane %v897, 1
    %v899 = vadd.f32 %v897, %v898
    %s900 = sld [smem:[#allocation2]]
    %v901 = vstv %s900
    %v902 = vadd.f32 %v899, %v901
    %v903 = vtanh.pop %v902
    %v904 = vmul.f32 %v903, 127.5
    %v905 = vadd.f32 %v904, 127.5
    %vm906 = vcmask 57344
    %907 = vst.msk [vmem:[#allocation3] sm:$0x1] %vm906, %v905
    // Predicated region
    $region22: #{tpu_custom_call.1} parent=1 // pred_check
      _
    $region23: #{tpu_custom_call.1} parent=1 // pred_check_branch
      %909 = sbr.rel (0) target = $region25
    $region24: #{tpu_custom_call.1} parent=1 // pred_region
      %s911 = ssub.s32 16, 16
      %912 = vsyncadd [#allocation4], %s911
      %s914 = sshll.u32 [#allocation3], 4
      %s915 = int_to_ptr.vmem [resolvable:$true] %s914
      %917 = dma.vmem_to_hbm [thread:$0]  %s915, 16, %s5, [#allocation4]
    $region25: #{tpu_custom_call.1} parent=1 // pred_fallthru
      _
    // Predicated region
    $region26: #{tpu_custom_call.1} parent=1 // pred_check
      _
    $region27: #{tpu_custom_call.1} parent=1 // pred_check_branch
      %919 = sbr.rel (0) target = $region29
    $region28: #{tpu_custom_call.1} parent=1 // pred_region
      %920 = dma.done [#allocation4], 16
    $region29: #{tpu_custom_call.1} parent=1 // pred_fallthru
      _
    %921 = vsyncpa [#allocation4], 1

</llo_original>
